<compile_context>
chip_gen: v7x
topology: tpu7x:2x2x1
jax: 0.10.0
libtpu: 0.0.40
codegen_flags: <defaults>
</compile_context>

<pallas_src>
import functools

import jax
import jax.numpy as jnp
from jax import lax
from jax.experimental import pallas as pl
from jax.experimental.pallas import tpu as pltpu

_EPS_MIN = 1e-7
_EPS_MAX = 1e7
_LANES = 128
_MAX_ROWS = 512     # max rows of 128 boxes per grid step (512*128 = 65536 boxes)
_CHUNK = 16         # sublane rows processed per inner-loop iteration


def _gwd3d_kernel(n_ref, pt_ref, out_ref, *, fun, tau, alpha, r_tile, chunk):
    """n_ref: (1,) int32 scalar-prefetch (SMEM).
    pt_ref: (2, 7, r_tile, 128) f32; pt_ref[0]=pred, pt_ref[1]=target,
    field order [x, y, z, w, h, l, r].
    out_ref: (8, 128) per-tile partial sums (lane/sublane-dense store)."""
    n_boxes = n_ref[0]
    n_chunks = r_tile // chunk
    tile_box0 = pl.program_id(0) * (r_tile * _LANES)

    def chunk_partial(c, masked):
        row0 = pl.multiple_of(c * chunk, chunk)

        def unpack(b):
            x = pt_ref[b, 0, pl.ds(row0, chunk), :]
            y = pt_ref[b, 1, pl.ds(row0, chunk), :]
            z = pt_ref[b, 2, pl.ds(row0, chunk), :]
            w = pt_ref[b, 3, pl.ds(row0, chunk), :]
            h = pt_ref[b, 4, pl.ds(row0, chunk), :]
            l = pt_ref[b, 5, pl.ds(row0, chunk), :]
            r = pt_ref[b, 6, pl.ds(row0, chunk), :]
            # preprocess(): xyz += center_offset * whl, center_offset=(0,0,0.5)
            # (offset uses the *unclamped* l, matching the PyTorch code).
            z = z + 0.5 * l
            w = jnp.clip(w, _EPS_MIN, _EPS_MAX)
            h = jnp.clip(h, _EPS_MIN, _EPS_MAX)
            l = jnp.clip(l, _EPS_MIN, _EPS_MAX)
            # Swh = 0.5 * diag(w, h),  Sl = 0.5 * l
            return x, y, z, 0.5 * w, 0.5 * h, 0.5 * l, r

        xp, yp, zp, swp, shp, slp, rp = unpack(0)
        xt, yt, zt, swt, sht, slt, rt = unpack(1)

        # xyz distance
        xyz_d = (xp - xt) ** 2 + (yp - yt) ** 2 + (zp - zt) ** 2

        # diag(Swh)^2
        ap, bp = swp * swp, shp * shp
        at, bt = swt * swt, sht * sht

        # trace(Sigmawh_p @ Sigmawh_t) for Sigma = R diag(a,b) R^T via the 2x2
        # identity: 0.5*[(ap+bp)(at+bt) + (ap-bp)(at-bt)*cos(2*(rp-rt))].
        t_tr = 0.5 * ((ap + bp) * (at + bt)
                      + (ap - bp) * (at - bt) * jnp.cos(2.0 * (rp - rt)))
        # sqrt(det(Sigmawh_p) * det(Sigmawh_t)) = (swp*shp) * (swt*sht)
        t_det_sqrt = (swp * shp) * (swt * sht)

        whlr = ap + bp + at + bt
        whlr = whlr - 2.0 * jnp.sqrt(jnp.maximum(t_tr + 2.0 * t_det_sqrt, 0.0))
        whlr = whlr + (slp - slt) ** 2

        dist = jnp.sqrt(jnp.maximum(xyz_d + (alpha * alpha) * whlr, 0.0))

        # normalize=True.  log(slp)+log(slt) fused into log(slp*slt)
        # (product >= ~2.5e-15, no f32 underflow); the 1/scale inversion is
        # folded into the exp that is already issued.
        logsum = jnp.log(t_det_sqrt) + jnp.log(slp * slt)
        dist = dist * (0.5 * jnp.exp(logsum * (-1.0 / 6.0)))

        # postprocess
        if fun == "log1p":
            dist = jnp.log1p(dist)
        elif fun == "none":
            pass
        # TODO(synk): other `fun` modes ('expm1', 'nlog') are unused for gwd3d.
        if tau >= 1.0:
            dist = 1.0 - tau / (tau + dist)   # exact divide: no approx bias

        if masked:
            # Padded boxes do NOT reduce to 0 after the eps clamp +
            # normalization, so this mask is load-bearing for boundary tiles.
            row_i = lax.broadcasted_iota(jnp.int32, (chunk, _LANES), 0)
            lane_i = lax.broadcasted_iota(jnp.int32, (chunk, _LANES), 1)
            gbox = tile_box0 + (row0 + row_i) * _LANES + lane_i
            dist = jnp.where(gbox < n_boxes, dist, 0.0)

        part = dist[0:8, :]
        for rr in range(8, chunk, 8):
            part = part + dist[rr:rr + 8, :]
        return part

    def accumulate(masked):
        acc0 = jnp.zeros((8, _LANES), jnp.float32)
        if n_chunks == 1:
            return acc0 + chunk_partial(0, masked)
        return lax.fori_loop(
            0, n_chunks,
            lambda c, acc: acc + chunk_partial(c, masked),
            acc0, unroll=2)

    tile_box_end = tile_box0 + r_tile * _LANES

    @pl.when(tile_box_end <= n_boxes)     # tile fully valid: no mask ops
    def _():
        out_ref[...] = accumulate(masked=False)

    @pl.when(tile_box_end > n_boxes)      # tile touches / is past n boundary
    def _():
        out_ref[...] = accumulate(masked=True)


def gd_loss_gwd3d(pred, target, *, fun="log1p", tau=1.0, alpha=1.0,
                  loss_weight=1.0):
    """pred, target: (N, 7) arrays of (x, y, z, w, h, l, r). Returns scalar."""
    pred = jnp.asarray(pred, jnp.float32).reshape(-1, 7)
    target = jnp.asarray(target, jnp.float32).reshape(-1, 7)
    n = pred.shape[0]

    # Bucket the padded row count to a power of two (>= 16) so distinct N do
    # not trigger per-N Mosaic recompiles; the exact n is a runtime scalar.
    rows = max(pl.cdiv(n, _LANES), 1)
    rows_pad = max(16, pl.next_power_of_2(rows))
    r_tile = min(_MAX_ROWS, rows_pad // 2)    # grid >= 2 -> both v7x TCs busy
    grid = rows_pad // r_tile
    chunk = min(_CHUNK, r_tile)
    npad = rows_pad * _LANES

    # Single fused transpose+pad+reshape for both operands (one XLA copy,
    # one field-major (2,7,rows_pad,128) kernel input stream).
    # TODO(synk): a producer emitting field-major (2, 7, N) directly would
    # remove this copy entirely (the kernel only needs 56 B/box of HBM).
    both = jnp.stack([pred, target], axis=0)               # (2, N, 7)
    both = jnp.transpose(both, (0, 2, 1))                   # (2, 7, N)
    both = jnp.pad(both, ((0, 0), (0, 0), (0, npad - n)))   # (2, 7, npad)
    both = both.reshape(2, 7, rows_pad, _LANES)             # contiguous reshape

    kernel = functools.partial(_gwd3d_kernel, fun=fun, tau=tau, alpha=alpha,
                               r_tile=r_tile, chunk=chunk)

    partial_sums = pl.pallas_call(
        kernel,
        out_shape=jax.ShapeDtypeStruct((grid * 8, _LANES), jnp.float32),
        grid_spec=pltpu.PrefetchScalarGridSpec(
            num_scalar_prefetch=1,
            grid=(grid,),
            in_specs=[pl.BlockSpec((2, 7, r_tile, _LANES),
                                   lambda i, n_sref: (0, 0, i, 0))],
            out_specs=pl.BlockSpec((8, _LANES), lambda i, n_sref: (i, 0)),
        ),
        compiler_params=pltpu.CompilerParams(
            dimension_semantics=("parallel",)),
    )(jnp.array([n], jnp.int32), both)

    # weighted_loss: weight=None, avg_factor=None, reduction='mean'.
    # max(n, 1) guards the empty-batch case (0.0 instead of NaN).
    return (partial_sums.sum() / max(n, 1)) * loss_weight


def _gwd3d_reference(pred, target, fun="log1p", tau=1.0, alpha=1.0,
                     loss_weight=1.0):
    """Pure-JAX reference mirroring the PyTorch gwd3d path (exact form)."""
    pred = jnp.asarray(pred, jnp.float32).reshape(-1, 7)
    target = jnp.asarray(target, jnp.float32).reshape(-1, 7)

    def prep(b):
        xyz = b[:, :3] + jnp.array([0.0, 0.0, 0.5], jnp.float32) * b[:, 3:6]
        w = jnp.clip(b[:, 3], _EPS_MIN, _EPS_MAX)
        h = jnp.clip(b[:, 4], _EPS_MIN, _EPS_MAX)
        l = jnp.clip(b[:, 5], _EPS_MIN, _EPS_MAX)
        r = b[:, 6]
        return xyz, 0.5 * w, 0.5 * h, 0.5 * l, jnp.cos(r), jnp.sin(r)

    xyz_p, swp, shp, slp, cp, sp = prep(pred)
    xyz_t, swt, sht, slt, ct, st = prep(target)
    xyz_d = ((xyz_p - xyz_t) ** 2).sum(-1)
    ap, bp, at, bt = swp ** 2, shp ** 2, swt ** 2, sht ** 2
    A00 = cp * cp * ap + sp * sp * bp
    A11 = sp * sp * ap + cp * cp * bp
    A01 = cp * sp * (ap - bp)
    B00 = ct * ct * at + st * st * bt
    B11 = st * st * at + ct * ct * bt
    B01 = ct * st * (at - bt)
    t_tr = A00 * B00 + 2.0 * A01 * B01 + A11 * B11
    t_det_sqrt = swp * shp * swt * sht
    whlr = (ap + bp + at + bt
            - 2.0 * jnp.sqrt(jnp.maximum(t_tr + 2.0 * t_det_sqrt, 0.0))
            + (slp - slt) ** 2)
    dist = jnp.sqrt(jnp.maximum(xyz_d + alpha * alpha * whlr, 0.0))
    logsum = jnp.log(t_det_sqrt) + jnp.log(slp) + jnp.log(slt)
    dist = dist / (2.0 * jnp.exp(logsum / 6.0))
    if fun == "log1p":
        dist = jnp.log1p(dist)
    if tau >= 1.0:
        dist = 1.0 - tau / (tau + dist)
    return dist.mean() * loss_weight


if __name__ == "__main__":
    key = jax.random.PRNGKey(0)

    def make_boxes(k, n):
        kxyz, kwhl, kr = jax.random.split(k, 3)
        xyz = jax.random.normal(kxyz, (n, 3), jnp.float32) * 2.0
        whl = jax.random.uniform(kwhl, (n, 3), jnp.float32,
                                 minval=0.5, maxval=3.0)
        r = jax.random.uniform(kr, (n, 1), jnp.float32,
                               minval=-3.14, maxval=3.14)
        return jnp.concatenate([xyz, whl, r], axis=-1)  # (n, 7)

    # N=8: tiny case; N=3000: exercises both pl.when branches (one fully
    # valid tile, one partially masked tile) and the 16-row chunk reduction.
    for n in (8, 3000):
        kp, kt, key = jax.random.split(key, 3)
        pred = make_boxes(kp, n)
        target = make_boxes(kt, n)

        loss = jax.block_until_ready(gd_loss_gwd3d(pred, target))
        assert loss.shape == ()
        assert bool(jnp.isfinite(loss))

        ref = jax.block_until_ready(_gwd3d_reference(pred, target))
        # trig identity + fused logs => small numerical differences allowed.
        assert abs(float(loss) - float(ref)) <= 1e-3 * max(1.0, abs(float(ref))), \
            (n, float(loss), float(ref))

    print("KERNEL_OK")
</pallas_src>

<mosaic_0001>
module attributes {stable_mosaic.version = 11 : i64} {
  func.func @_gwd3d_kernel(%arg0: i32, %arg1: memref<1xi32, #tpu.memory_space<smem>>, %arg2: memref<2x7x8x128xf32, #tpu.memory_space<vmem>>, %arg3: memref<8x128xf32, #tpu.memory_space<vmem>>) attributes {dimension_semantics = [#tpu.dimension_semantics<parallel>], iteration_bounds = array<i64: 2>, scalar_prefetch = 1 : i64, scratch_operands = 0 : i64, tpu.core_type = #tpu.core_type<tc>, window_params = [{transform_indices = @transform_0, window_bounds = array<i64: 2, 7, 8, 128>}, {transform_indices = @transform_1, window_bounds = array<i64: 8, 128>}]} {
    %c0 = arith.constant 0 : index
    %0 = memref.load %arg1[%c0] : memref<1xi32, #tpu.memory_space<smem>>
    %c1024_i32 = arith.constant 1024 : i32
    %1 = arith.muli %arg0, %c1024_i32 : i32
    %c1024_i32_0 = arith.constant 1024 : i32
    %2 = arith.addi %1, %c1024_i32_0 : i32
    %3 = arith.cmpi sle, %2, %0 : i32
    %4 = arith.extui %3 : i1 to i32
    %c0_i32 = arith.constant 0 : i32
    %5 = arith.cmpi ne, %4, %c0_i32 : i32
    scf.if %5 {
      %cst = arith.constant 0.000000e+00 : f32
      %9 = vector.broadcast %cst : f32 to vector<8x128xf32>
      %c0_i32_2 = arith.constant 0 : i32
      %10 = tpu.assume_multiple %c0_i32_2, 8 : i32
      %c0_3 = arith.constant 0 : index
      %c0_4 = arith.constant 0 : index
      %11 = arith.index_cast %10 : i32 to index
      %c0_5 = arith.constant 0 : index
      %12 = vector.load %arg2[%c0_3, %c0_4, %11, %c0_5] : memref<2x7x8x128xf32, #tpu.memory_space<vmem>>, vector<1x1x8x128xf32>
      %13 = vector.shape_cast %12 : vector<1x1x8x128xf32> to vector<8x128xf32>
      %c0_6 = arith.constant 0 : index
      %c1 = arith.constant 1 : index
      %14 = arith.index_cast %10 : i32 to index
      %c0_7 = arith.constant 0 : index
      %15 = vector.load %arg2[%c0_6, %c1, %14, %c0_7] : memref<2x7x8x128xf32, #tpu.memory_space<vmem>>, vector<1x1x8x128xf32>
      %16 = vector.shape_cast %15 : vector<1x1x8x128xf32> to vector<8x128xf32>
      %c0_8 = arith.constant 0 : index
      %c2 = arith.constant 2 : index
      %17 = arith.index_cast %10 : i32 to index
      %c0_9 = arith.constant 0 : index
      %18 = vector.load %arg2[%c0_8, %c2, %17, %c0_9] : memref<2x7x8x128xf32, #tpu.memory_space<vmem>>, vector<1x1x8x128xf32>
      %19 = vector.shape_cast %18 : vector<1x1x8x128xf32> to vector<8x128xf32>
      %c0_10 = arith.constant 0 : index
      %c3 = arith.constant 3 : index
      %20 = arith.index_cast %10 : i32 to index
      %c0_11 = arith.constant 0 : index
      %21 = vector.load %arg2[%c0_10, %c3, %20, %c0_11] : memref<2x7x8x128xf32, #tpu.memory_space<vmem>>, vector<1x1x8x128xf32>
      %22 = vector.shape_cast %21 : vector<1x1x8x128xf32> to vector<8x128xf32>
      %c0_12 = arith.constant 0 : index
      %c4 = arith.constant 4 : index
      %23 = arith.index_cast %10 : i32 to index
      %c0_13 = arith.constant 0 : index
      %24 = vector.load %arg2[%c0_12, %c4, %23, %c0_13] : memref<2x7x8x128xf32, #tpu.memory_space<vmem>>, vector<1x1x8x128xf32>
      %25 = vector.shape_cast %24 : vector<1x1x8x128xf32> to vector<8x128xf32>
      %c0_14 = arith.constant 0 : index
      %c5 = arith.constant 5 : index
      %26 = arith.index_cast %10 : i32 to index
      %c0_15 = arith.constant 0 : index
      %27 = vector.load %arg2[%c0_14, %c5, %26, %c0_15] : memref<2x7x8x128xf32, #tpu.memory_space<vmem>>, vector<1x1x8x128xf32>
      %28 = vector.shape_cast %27 : vector<1x1x8x128xf32> to vector<8x128xf32>
      %c0_16 = arith.constant 0 : index
      %c6 = arith.constant 6 : index
      %29 = arith.index_cast %10 : i32 to index
      %c0_17 = arith.constant 0 : index
      %30 = vector.load %arg2[%c0_16, %c6, %29, %c0_17] : memref<2x7x8x128xf32, #tpu.memory_space<vmem>>, vector<1x1x8x128xf32>
      %31 = vector.shape_cast %30 : vector<1x1x8x128xf32> to vector<8x128xf32>
      %cst_18 = arith.constant 5.000000e-01 : f32
      %32 = vector.broadcast %cst_18 : f32 to vector<8x128xf32>
      %33 = arith.mulf %32, %28 : vector<8x128xf32>
      %34 = arith.addf %19, %33 : vector<8x128xf32>
      %cst_19 = arith.constant 1.000000e-07 : f32
      %cst_20 = arith.constant 1.000000e+07 : f32
      %35 = vector.broadcast %cst_19 : f32 to vector<8x128xf32>
      %36 = arith.maximumf %35, %22 : vector<8x128xf32>
      %37 = vector.broadcast %cst_20 : f32 to vector<8x128xf32>
      %38 = arith.minimumf %37, %36 : vector<8x128xf32>
      %cst_21 = arith.constant 1.000000e-07 : f32
      %cst_22 = arith.constant 1.000000e+07 : f32
      %39 = vector.broadcast %cst_21 : f32 to vector<8x128xf32>
      %40 = arith.maximumf %39, %25 : vector<8x128xf32>
      %41 = vector.broadcast %cst_22 : f32 to vector<8x128xf32>
      %42 = arith.minimumf %41, %40 : vector<8x128xf32>
      %cst_23 = arith.constant 1.000000e-07 : f32
      %cst_24 = arith.constant 1.000000e+07 : f32
      %43 = vector.broadcast %cst_23 : f32 to vector<8x128xf32>
      %44 = arith.maximumf %43, %28 : vector<8x128xf32>
      %45 = vector.broadcast %cst_24 : f32 to vector<8x128xf32>
      %46 = arith.minimumf %45, %44 : vector<8x128xf32>
      %cst_25 = arith.constant 5.000000e-01 : f32
      %47 = vector.broadcast %cst_25 : f32 to vector<8x128xf32>
      %48 = arith.mulf %47, %38 : vector<8x128xf32>
      %cst_26 = arith.constant 5.000000e-01 : f32
      %49 = vector.broadcast %cst_26 : f32 to vector<8x128xf32>
      %50 = arith.mulf %49, %42 : vector<8x128xf32>
      %cst_27 = arith.constant 5.000000e-01 : f32
      %51 = vector.broadcast %cst_27 : f32 to vector<8x128xf32>
      %52 = arith.mulf %51, %46 : vector<8x128xf32>
      %c1_28 = arith.constant 1 : index
      %c0_29 = arith.constant 0 : index
      %53 = arith.index_cast %10 : i32 to index
      %c0_30 = arith.constant 0 : index
      %54 = vector.load %arg2[%c1_28, %c0_29, %53, %c0_30] : memref<2x7x8x128xf32, #tpu.memory_space<vmem>>, vector<1x1x8x128xf32>
      %55 = vector.shape_cast %54 : vector<1x1x8x128xf32> to vector<8x128xf32>
      %c1_31 = arith.constant 1 : index
      %c1_32 = arith.constant 1 : index
      %56 = arith.index_cast %10 : i32 to index
      %c0_33 = arith.constant 0 : index
      %57 = vector.load %arg2[%c1_31, %c1_32, %56, %c0_33] : memref<2x7x8x128xf32, #tpu.memory_space<vmem>>, vector<1x1x8x128xf32>
      %58 = vector.shape_cast %57 : vector<1x1x8x128xf32> to vector<8x128xf32>
      %c1_34 = arith.constant 1 : index
      %c2_35 = arith.constant 2 : index
      %59 = arith.index_cast %10 : i32 to index
      %c0_36 = arith.constant 0 : index
      %60 = vector.load %arg2[%c1_34, %c2_35, %59, %c0_36] : memref<2x7x8x128xf32, #tpu.memory_space<vmem>>, vector<1x1x8x128xf32>
      %61 = vector.shape_cast %60 : vector<1x1x8x128xf32> to vector<8x128xf32>
      %c1_37 = arith.constant 1 : index
      %c3_38 = arith.constant 3 : index
      %62 = arith.index_cast %10 : i32 to index
      %c0_39 = arith.constant 0 : index
      %63 = vector.load %arg2[%c1_37, %c3_38, %62, %c0_39] : memref<2x7x8x128xf32, #tpu.memory_space<vmem>>, vector<1x1x8x128xf32>
      %64 = vector.shape_cast %63 : vector<1x1x8x128xf32> to vector<8x128xf32>
      %c1_40 = arith.constant 1 : index
      %c4_41 = arith.constant 4 : index
      %65 = arith.index_cast %10 : i32 to index
      %c0_42 = arith.constant 0 : index
      %66 = vector.load %arg2[%c1_40, %c4_41, %65, %c0_42] : memref<2x7x8x128xf32, #tpu.memory_space<vmem>>, vector<1x1x8x128xf32>
      %67 = vector.shape_cast %66 : vector<1x1x8x128xf32> to vector<8x128xf32>
      %c1_43 = arith.constant 1 : index
      %c5_44 = arith.constant 5 : index
      %68 = arith.index_cast %10 : i32 to index
      %c0_45 = arith.constant 0 : index
      %69 = vector.load %arg2[%c1_43, %c5_44, %68, %c0_45] : memref<2x7x8x128xf32, #tpu.memory_space<vmem>>, vector<1x1x8x128xf32>
      %70 = vector.shape_cast %69 : vector<1x1x8x128xf32> to vector<8x128xf32>
      %c1_46 = arith.constant 1 : index
      %c6_47 = arith.constant 6 : index
      %71 = arith.index_cast %10 : i32 to index
      %c0_48 = arith.constant 0 : index
      %72 = vector.load %arg2[%c1_46, %c6_47, %71, %c0_48] : memref<2x7x8x128xf32, #tpu.memory_space<vmem>>, vector<1x1x8x128xf32>
      %73 = vector.shape_cast %72 : vector<1x1x8x128xf32> to vector<8x128xf32>
      %cst_49 = arith.constant 5.000000e-01 : f32
      %74 = vector.broadcast %cst_49 : f32 to vector<8x128xf32>
      %75 = arith.mulf %74, %70 : vector<8x128xf32>
      %76 = arith.addf %61, %75 : vector<8x128xf32>
      %cst_50 = arith.constant 1.000000e-07 : f32
      %cst_51 = arith.constant 1.000000e+07 : f32
      %77 = vector.broadcast %cst_50 : f32 to vector<8x128xf32>
      %78 = arith.maximumf %77, %64 : vector<8x128xf32>
      %79 = vector.broadcast %cst_51 : f32 to vector<8x128xf32>
      %80 = arith.minimumf %79, %78 : vector<8x128xf32>
      %cst_52 = arith.constant 1.000000e-07 : f32
      %cst_53 = arith.constant 1.000000e+07 : f32
      %81 = vector.broadcast %cst_52 : f32 to vector<8x128xf32>
      %82 = arith.maximumf %81, %67 : vector<8x128xf32>
      %83 = vector.broadcast %cst_53 : f32 to vector<8x128xf32>
      %84 = arith.minimumf %83, %82 : vector<8x128xf32>
      %cst_54 = arith.constant 1.000000e-07 : f32
      %cst_55 = arith.constant 1.000000e+07 : f32
      %85 = vector.broadcast %cst_54 : f32 to vector<8x128xf32>
      %86 = arith.maximumf %85, %70 : vector<8x128xf32>
      %87 = vector.broadcast %cst_55 : f32 to vector<8x128xf32>
      %88 = arith.minimumf %87, %86 : vector<8x128xf32>
      %cst_56 = arith.constant 5.000000e-01 : f32
      %89 = vector.broadcast %cst_56 : f32 to vector<8x128xf32>
      %90 = arith.mulf %89, %80 : vector<8x128xf32>
      %cst_57 = arith.constant 5.000000e-01 : f32
      %91 = vector.broadcast %cst_57 : f32 to vector<8x128xf32>
      %92 = arith.mulf %91, %84 : vector<8x128xf32>
      %cst_58 = arith.constant 5.000000e-01 : f32
      %93 = vector.broadcast %cst_58 : f32 to vector<8x128xf32>
      %94 = arith.mulf %93, %88 : vector<8x128xf32>
      %95 = arith.subf %13, %55 : vector<8x128xf32>
      %96 = arith.mulf %95, %95 : vector<8x128xf32>
      %97 = arith.subf %16, %58 : vector<8x128xf32>
      %98 = arith.mulf %97, %97 : vector<8x128xf32>
      %99 = arith.addf %96, %98 : vector<8x128xf32>
      %100 = arith.subf %34, %76 : vector<8x128xf32>
      %101 = arith.mulf %100, %100 : vector<8x128xf32>
      %102 = arith.addf %99, %101 : vector<8x128xf32>
      %103 = arith.mulf %48, %48 : vector<8x128xf32>
      %104 = arith.mulf %50, %50 : vector<8x128xf32>
      %105 = arith.mulf %90, %90 : vector<8x128xf32>
      %106 = arith.mulf %92, %92 : vector<8x128xf32>
      %107 = arith.addf %103, %104 : vector<8x128xf32>
      %108 = arith.addf %105, %106 : vector<8x128xf32>
      %109 = arith.mulf %107, %108 : vector<8x128xf32>
      %110 = arith.subf %103, %104 : vector<8x128xf32>
      %111 = arith.subf %105, %106 : vector<8x128xf32>
      %112 = arith.mulf %110, %111 : vector<8x128xf32>
      %113 = arith.subf %31, %73 : vector<8x128xf32>
      %cst_59 = arith.constant 2.000000e+00 : f32
      %114 = vector.broadcast %cst_59 : f32 to vector<8x128xf32>
      %115 = arith.mulf %114, %113 : vector<8x128xf32>
      %116 = math.cos %115 : vector<8x128xf32>
      %117 = arith.mulf %112, %116 : vector<8x128xf32>
      %118 = arith.addf %109, %117 : vector<8x128xf32>
      %cst_60 = arith.constant 5.000000e-01 : f32
      %119 = vector.broadcast %cst_60 : f32 to vector<8x128xf32>
      %120 = arith.mulf %119, %118 : vector<8x128xf32>
      %121 = arith.mulf %48, %50 : vector<8x128xf32>
      %122 = arith.mulf %90, %92 : vector<8x128xf32>
      %123 = arith.mulf %121, %122 : vector<8x128xf32>
      %124 = arith.addf %103, %104 : vector<8x128xf32>
      %125 = arith.addf %124, %105 : vector<8x128xf32>
      %126 = arith.addf %125, %106 : vector<8x128xf32>
      %cst_61 = arith.constant 2.000000e+00 : f32
      %127 = vector.broadcast %cst_61 : f32 to vector<8x128xf32>
      %128 = arith.mulf %127, %123 : vector<8x128xf32>
      %129 = arith.addf %120, %128 : vector<8x128xf32>
      %cst_62 = arith.constant 0.000000e+00 : f32
      %130 = vector.broadcast %cst_62 : f32 to vector<8x128xf32>
      %131 = arith.maximumf %129, %130 : vector<8x128xf32>
      %132 = math.sqrt %131 : vector<8x128xf32>
      %cst_63 = arith.constant 2.000000e+00 : f32
      %133 = vector.broadcast %cst_63 : f32 to vector<8x128xf32>
      %134 = arith.mulf %133, %132 : vector<8x128xf32>
      %135 = arith.subf %126, %134 : vector<8x128xf32>
      %136 = arith.subf %52, %94 : vector<8x128xf32>
      %137 = arith.mulf %136, %136 : vector<8x128xf32>
      %138 = arith.addf %135, %137 : vector<8x128xf32>
      %cst_64 = arith.constant 1.000000e+00 : f32
      %139 = vector.broadcast %cst_64 : f32 to vector<8x128xf32>
      %140 = arith.mulf %139, %138 : vector<8x128xf32>
      %141 = arith.addf %102, %140 : vector<8x128xf32>
      %cst_65 = arith.constant 0.000000e+00 : f32
      %142 = vector.broadcast %cst_65 : f32 to vector<8x128xf32>
      %143 = arith.maximumf %141, %142 : vector<8x128xf32>
      %144 = math.sqrt %143 : vector<8x128xf32>
      %145 = math.log %123 : vector<8x128xf32>
      %146 = arith.mulf %52, %94 : vector<8x128xf32>
      %147 = math.log %146 : vector<8x128xf32>
      %148 = arith.addf %145, %147 : vector<8x128xf32>
      %cst_66 = arith.constant -0.166666672 : f32
      %149 = vector.broadcast %cst_66 : f32 to vector<8x128xf32>
      %150 = arith.mulf %148, %149 : vector<8x128xf32>
      %151 = math.exp %150 : vector<8x128xf32>
      %cst_67 = arith.constant 5.000000e-01 : f32
      %152 = vector.broadcast %cst_67 : f32 to vector<8x128xf32>
      %153 = arith.mulf %152, %151 : vector<8x128xf32>
      %154 = arith.mulf %144, %153 : vector<8x128xf32>
      %155 = math.log1p %154 : vector<8x128xf32>
      %cst_68 = arith.constant 1.000000e+00 : f32
      %156 = vector.broadcast %cst_68 : f32 to vector<8x128xf32>
      %157 = arith.addf %156, %155 : vector<8x128xf32>
      %cst_69 = arith.constant 1.000000e+00 : f32
      %158 = vector.broadcast %cst_69 : f32 to vector<8x128xf32>
      %159 = arith.divf %158, %157 : vector<8x128xf32>
      %cst_70 = arith.constant 1.000000e+00 : f32
      %160 = vector.broadcast %cst_70 : f32 to vector<8x128xf32>
      %161 = arith.subf %160, %159 : vector<8x128xf32>
      %162 = arith.addf %9, %161 : vector<8x128xf32>
      %c0_71 = arith.constant 0 : index
      %c0_72 = arith.constant 0 : index
      %163 = vector.load %arg3[%c0_71, %c0_72] : memref<8x128xf32, #tpu.memory_space<vmem>>, vector<8x128xf32>
      tpu.vector_store %arg3[%c0_71, %c0_72], %162 {strides = array<i32>} : memref<8x128xf32, #tpu.memory_space<vmem>>, vector<8x128xf32>,
    } else {
    }
    %6 = arith.cmpi sgt, %2, %0 : i32
    %7 = arith.extui %6 : i1 to i32
    %c0_i32_1 = arith.constant 0 : i32
    %8 = arith.cmpi ne, %7, %c0_i32_1 : i32
    scf.if %8 {
      %cst = arith.constant 0.000000e+00 : f32
      %9 = vector.broadcast %cst : f32 to vector<8x128xf32>
      %c0_i32_2 = arith.constant 0 : i32
      %10 = tpu.assume_multiple %c0_i32_2, 8 : i32
      %c0_3 = arith.constant 0 : index
      %c0_4 = arith.constant 0 : index
      %11 = arith.index_cast %10 : i32 to index
      %c0_5 = arith.constant 0 : index
      %12 = vector.load %arg2[%c0_3, %c0_4, %11, %c0_5] : memref<2x7x8x128xf32, #tpu.memory_space<vmem>>, vector<1x1x8x128xf32>
      %13 = vector.shape_cast %12 : vector<1x1x8x128xf32> to vector<8x128xf32>
      %c0_6 = arith.constant 0 : index
      %c1 = arith.constant 1 : index
      %14 = arith.index_cast %10 : i32 to index
      %c0_7 = arith.constant 0 : index
      %15 = vector.load %arg2[%c0_6, %c1, %14, %c0_7] : memref<2x7x8x128xf32, #tpu.memory_space<vmem>>, vector<1x1x8x128xf32>
      %16 = vector.shape_cast %15 : vector<1x1x8x128xf32> to vector<8x128xf32>
      %c0_8 = arith.constant 0 : index
      %c2 = arith.constant 2 : index
      %17 = arith.index_cast %10 : i32 to index
      %c0_9 = arith.constant 0 : index
      %18 = vector.load %arg2[%c0_8, %c2, %17, %c0_9] : memref<2x7x8x128xf32, #tpu.memory_space<vmem>>, vector<1x1x8x128xf32>
      %19 = vector.shape_cast %18 : vector<1x1x8x128xf32> to vector<8x128xf32>
      %c0_10 = arith.constant 0 : index
      %c3 = arith.constant 3 : index
      %20 = arith.index_cast %10 : i32 to index
      %c0_11 = arith.constant 0 : index
      %21 = vector.load %arg2[%c0_10, %c3, %20, %c0_11] : memref<2x7x8x128xf32, #tpu.memory_space<vmem>>, vector<1x1x8x128xf32>
      %22 = vector.shape_cast %21 : vector<1x1x8x128xf32> to vector<8x128xf32>
      %c0_12 = arith.constant 0 : index
      %c4 = arith.constant 4 : index
      %23 = arith.index_cast %10 : i32 to index
      %c0_13 = arith.constant 0 : index
      %24 = vector.load %arg2[%c0_12, %c4, %23, %c0_13] : memref<2x7x8x128xf32, #tpu.memory_space<vmem>>, vector<1x1x8x128xf32>
      %25 = vector.shape_cast %24 : vector<1x1x8x128xf32> to vector<8x128xf32>
      %c0_14 = arith.constant 0 : index
      %c5 = arith.constant 5 : index
      %26 = arith.index_cast %10 : i32 to index
      %c0_15 = arith.constant 0 : index
      %27 = vector.load %arg2[%c0_14, %c5, %26, %c0_15] : memref<2x7x8x128xf32, #tpu.memory_space<vmem>>, vector<1x1x8x128xf32>
      %28 = vector.shape_cast %27 : vector<1x1x8x128xf32> to vector<8x128xf32>
      %c0_16 = arith.constant 0 : index
      %c6 = arith.constant 6 : index
      %29 = arith.index_cast %10 : i32 to index
      %c0_17 = arith.constant 0 : index
      %30 = vector.load %arg2[%c0_16, %c6, %29, %c0_17] : memref<2x7x8x128xf32, #tpu.memory_space<vmem>>, vector<1x1x8x128xf32>
      %31 = vector.shape_cast %30 : vector<1x1x8x128xf32> to vector<8x128xf32>
      %cst_18 = arith.constant 5.000000e-01 : f32
      %32 = vector.broadcast %cst_18 : f32 to vector<8x128xf32>
      %33 = arith.mulf %32, %28 : vector<8x128xf32>
      %34 = arith.addf %19, %33 : vector<8x128xf32>
      %cst_19 = arith.constant 1.000000e-07 : f32
      %cst_20 = arith.constant 1.000000e+07 : f32
      %35 = vector.broadcast %cst_19 : f32 to vector<8x128xf32>
      %36 = arith.maximumf %35, %22 : vector<8x128xf32>
      %37 = vector.broadcast %cst_20 : f32 to vector<8x128xf32>
      %38 = arith.minimumf %37, %36 : vector<8x128xf32>
      %cst_21 = arith.constant 1.000000e-07 : f32
      %cst_22 = arith.constant 1.000000e+07 : f32
      %39 = vector.broadcast %cst_21 : f32 to vector<8x128xf32>
      %40 = arith.maximumf %39, %25 : vector<8x128xf32>
      %41 = vector.broadcast %cst_22 : f32 to vector<8x128xf32>
      %42 = arith.minimumf %41, %40 : vector<8x128xf32>
      %cst_23 = arith.constant 1.000000e-07 : f32
      %cst_24 = arith.constant 1.000000e+07 : f32
      %43 = vector.broadcast %cst_23 : f32 to vector<8x128xf32>
      %44 = arith.maximumf %43, %28 : vector<8x128xf32>
      %45 = vector.broadcast %cst_24 : f32 to vector<8x128xf32>
      %46 = arith.minimumf %45, %44 : vector<8x128xf32>
      %cst_25 = arith.constant 5.000000e-01 : f32
      %47 = vector.broadcast %cst_25 : f32 to vector<8x128xf32>
      %48 = arith.mulf %47, %38 : vector<8x128xf32>
      %cst_26 = arith.constant 5.000000e-01 : f32
      %49 = vector.broadcast %cst_26 : f32 to vector<8x128xf32>
      %50 = arith.mulf %49, %42 : vector<8x128xf32>
      %cst_27 = arith.constant 5.000000e-01 : f32
      %51 = vector.broadcast %cst_27 : f32 to vector<8x128xf32>
      %52 = arith.mulf %51, %46 : vector<8x128xf32>
      %c1_28 = arith.constant 1 : index
      %c0_29 = arith.constant 0 : index
      %53 = arith.index_cast %10 : i32 to index
      %c0_30 = arith.constant 0 : index
      %54 = vector.load %arg2[%c1_28, %c0_29, %53, %c0_30] : memref<2x7x8x128xf32, #tpu.memory_space<vmem>>, vector<1x1x8x128xf32>
      %55 = vector.shape_cast %54 : vector<1x1x8x128xf32> to vector<8x128xf32>
      %c1_31 = arith.constant 1 : index
      %c1_32 = arith.constant 1 : index
      %56 = arith.index_cast %10 : i32 to index
      %c0_33 = arith.constant 0 : index
      %57 = vector.load %arg2[%c1_31, %c1_32, %56, %c0_33] : memref<2x7x8x128xf32, #tpu.memory_space<vmem>>, vector<1x1x8x128xf32>
      %58 = vector.shape_cast %57 : vector<1x1x8x128xf32> to vector<8x128xf32>
      %c1_34 = arith.constant 1 : index
      %c2_35 = arith.constant 2 : index
      %59 = arith.index_cast %10 : i32 to index
      %c0_36 = arith.constant 0 : index
      %60 = vector.load %arg2[%c1_34, %c2_35, %59, %c0_36] : memref<2x7x8x128xf32, #tpu.memory_space<vmem>>, vector<1x1x8x128xf32>
      %61 = vector.shape_cast %60 : vector<1x1x8x128xf32> to vector<8x128xf32>
      %c1_37 = arith.constant 1 : index
      %c3_38 = arith.constant 3 : index
      %62 = arith.index_cast %10 : i32 to index
      %c0_39 = arith.constant 0 : index
      %63 = vector.load %arg2[%c1_37, %c3_38, %62, %c0_39] : memref<2x7x8x128xf32, #tpu.memory_space<vmem>>, vector<1x1x8x128xf32>
      %64 = vector.shape_cast %63 : vector<1x1x8x128xf32> to vector<8x128xf32>
      %c1_40 = arith.constant 1 : index
      %c4_41 = arith.constant 4 : index
      %65 = arith.index_cast %10 : i32 to index
      %c0_42 = arith.constant 0 : index
      %66 = vector.load %arg2[%c1_40, %c4_41, %65, %c0_42] : memref<2x7x8x128xf32, #tpu.memory_space<vmem>>, vector<1x1x8x128xf32>
      %67 = vector.shape_cast %66 : vector<1x1x8x128xf32> to vector<8x128xf32>
      %c1_43 = arith.constant 1 : index
      %c5_44 = arith.constant 5 : index
      %68 = arith.index_cast %10 : i32 to index
      %c0_45 = arith.constant 0 : index
      %69 = vector.load %arg2[%c1_43, %c5_44, %68, %c0_45] : memref<2x7x8x128xf32, #tpu.memory_space<vmem>>, vector<1x1x8x128xf32>
      %70 = vector.shape_cast %69 : vector<1x1x8x128xf32> to vector<8x128xf32>
      %c1_46 = arith.constant 1 : index
      %c6_47 = arith.constant 6 : index
      %71 = arith.index_cast %10 : i32 to index
      %c0_48 = arith.constant 0 : index
      %72 = vector.load %arg2[%c1_46, %c6_47, %71, %c0_48] : memref<2x7x8x128xf32, #tpu.memory_space<vmem>>, vector<1x1x8x128xf32>
      %73 = vector.shape_cast %72 : vector<1x1x8x128xf32> to vector<8x128xf32>
      %cst_49 = arith.constant 5.000000e-01 : f32
      %74 = vector.broadcast %cst_49 : f32 to vector<8x128xf32>
      %75 = arith.mulf %74, %70 : vector<8x128xf32>
      %76 = arith.addf %61, %75 : vector<8x128xf32>
      %cst_50 = arith.constant 1.000000e-07 : f32
      %cst_51 = arith.constant 1.000000e+07 : f32
      %77 = vector.broadcast %cst_50 : f32 to vector<8x128xf32>
      %78 = arith.maximumf %77, %64 : vector<8x128xf32>
      %79 = vector.broadcast %cst_51 : f32 to vector<8x128xf32>
      %80 = arith.minimumf %79, %78 : vector<8x128xf32>
      %cst_52 = arith.constant 1.000000e-07 : f32
      %cst_53 = arith.constant 1.000000e+07 : f32
      %81 = vector.broadcast %cst_52 : f32 to vector<8x128xf32>
      %82 = arith.maximumf %81, %67 : vector<8x128xf32>
      %83 = vector.broadcast %cst_53 : f32 to vector<8x128xf32>
      %84 = arith.minimumf %83, %82 : vector<8x128xf32>
      %cst_54 = arith.constant 1.000000e-07 : f32
      %cst_55 = arith.constant 1.000000e+07 : f32
      %85 = vector.broadcast %cst_54 : f32 to vector<8x128xf32>
      %86 = arith.maximumf %85, %70 : vector<8x128xf32>
      %87 = vector.broadcast %cst_55 : f32 to vector<8x128xf32>
      %88 = arith.minimumf %87, %86 : vector<8x128xf32>
      %cst_56 = arith.constant 5.000000e-01 : f32
      %89 = vector.broadcast %cst_56 : f32 to vector<8x128xf32>
      %90 = arith.mulf %89, %80 : vector<8x128xf32>
      %cst_57 = arith.constant 5.000000e-01 : f32
      %91 = vector.broadcast %cst_57 : f32 to vector<8x128xf32>
      %92 = arith.mulf %91, %84 : vector<8x128xf32>
      %cst_58 = arith.constant 5.000000e-01 : f32
      %93 = vector.broadcast %cst_58 : f32 to vector<8x128xf32>
      %94 = arith.mulf %93, %88 : vector<8x128xf32>
      %95 = arith.subf %13, %55 : vector<8x128xf32>
      %96 = arith.mulf %95, %95 : vector<8x128xf32>
      %97 = arith.subf %16, %58 : vector<8x128xf32>
      %98 = arith.mulf %97, %97 : vector<8x128xf32>
      %99 = arith.addf %96, %98 : vector<8x128xf32>
      %100 = arith.subf %34, %76 : vector<8x128xf32>
      %101 = arith.mulf %100, %100 : vector<8x128xf32>
      %102 = arith.addf %99, %101 : vector<8x128xf32>
      %103 = arith.mulf %48, %48 : vector<8x128xf32>
      %104 = arith.mulf %50, %50 : vector<8x128xf32>
      %105 = arith.mulf %90, %90 : vector<8x128xf32>
      %106 = arith.mulf %92, %92 : vector<8x128xf32>
      %107 = arith.addf %103, %104 : vector<8x128xf32>
      %108 = arith.addf %105, %106 : vector<8x128xf32>
      %109 = arith.mulf %107, %108 : vector<8x128xf32>
      %110 = arith.subf %103, %104 : vector<8x128xf32>
      %111 = arith.subf %105, %106 : vector<8x128xf32>
      %112 = arith.mulf %110, %111 : vector<8x128xf32>
      %113 = arith.subf %31, %73 : vector<8x128xf32>
      %cst_59 = arith.constant 2.000000e+00 : f32
      %114 = vector.broadcast %cst_59 : f32 to vector<8x128xf32>
      %115 = arith.mulf %114, %113 : vector<8x128xf32>
      %116 = math.cos %115 : vector<8x128xf32>
      %117 = arith.mulf %112, %116 : vector<8x128xf32>
      %118 = arith.addf %109, %117 : vector<8x128xf32>
      %cst_60 = arith.constant 5.000000e-01 : f32
      %119 = vector.broadcast %cst_60 : f32 to vector<8x128xf32>
      %120 = arith.mulf %119, %118 : vector<8x128xf32>
      %121 = arith.mulf %48, %50 : vector<8x128xf32>
      %122 = arith.mulf %90, %92 : vector<8x128xf32>
      %123 = arith.mulf %121, %122 : vector<8x128xf32>
      %124 = arith.addf %103, %104 : vector<8x128xf32>
      %125 = arith.addf %124, %105 : vector<8x128xf32>
      %126 = arith.addf %125, %106 : vector<8x128xf32>
      %cst_61 = arith.constant 2.000000e+00 : f32
      %127 = vector.broadcast %cst_61 : f32 to vector<8x128xf32>
      %128 = arith.mulf %127, %123 : vector<8x128xf32>
      %129 = arith.addf %120, %128 : vector<8x128xf32>
      %cst_62 = arith.constant 0.000000e+00 : f32
      %130 = vector.broadcast %cst_62 : f32 to vector<8x128xf32>
      %131 = arith.maximumf %129, %130 : vector<8x128xf32>
      %132 = math.sqrt %131 : vector<8x128xf32>
      %cst_63 = arith.constant 2.000000e+00 : f32
      %133 = vector.broadcast %cst_63 : f32 to vector<8x128xf32>
      %134 = arith.mulf %133, %132 : vector<8x128xf32>
      %135 = arith.subf %126, %134 : vector<8x128xf32>
      %136 = arith.subf %52, %94 : vector<8x128xf32>
      %137 = arith.mulf %136, %136 : vector<8x128xf32>
      %138 = arith.addf %135, %137 : vector<8x128xf32>
      %cst_64 = arith.constant 1.000000e+00 : f32
      %139 = vector.broadcast %cst_64 : f32 to vector<8x128xf32>
      %140 = arith.mulf %139, %138 : vector<8x128xf32>
      %141 = arith.addf %102, %140 : vector<8x128xf32>
      %cst_65 = arith.constant 0.000000e+00 : f32
      %142 = vector.broadcast %cst_65 : f32 to vector<8x128xf32>
      %143 = arith.maximumf %141, %142 : vector<8x128xf32>
      %144 = math.sqrt %143 : vector<8x128xf32>
      %145 = math.log %123 : vector<8x128xf32>
      %146 = arith.mulf %52, %94 : vector<8x128xf32>
      %147 = math.log %146 : vector<8x128xf32>
      %148 = arith.addf %145, %147 : vector<8x128xf32>
      %cst_66 = arith.constant -0.166666672 : f32
      %149 = vector.broadcast %cst_66 : f32 to vector<8x128xf32>
      %150 = arith.mulf %148, %149 : vector<8x128xf32>
      %151 = math.exp %150 : vector<8x128xf32>
      %cst_67 = arith.constant 5.000000e-01 : f32
      %152 = vector.broadcast %cst_67 : f32 to vector<8x128xf32>
      %153 = arith.mulf %152, %151 : vector<8x128xf32>
      %154 = arith.mulf %144, %153 : vector<8x128xf32>
      %155 = math.log1p %154 : vector<8x128xf32>
      %cst_68 = arith.constant 1.000000e+00 : f32
      %156 = vector.broadcast %cst_68 : f32 to vector<8x128xf32>
      %157 = arith.addf %156, %155 : vector<8x128xf32>
      %cst_69 = arith.constant 1.000000e+00 : f32
      %158 = vector.broadcast %cst_69 : f32 to vector<8x128xf32>
      %159 = arith.divf %158, %157 : vector<8x128xf32>
      %cst_70 = arith.constant 1.000000e+00 : f32
      %160 = vector.broadcast %cst_70 : f32 to vector<8x128xf32>
      %161 = arith.subf %160, %159 : vector<8x128xf32>
      %162 = tpu.iota {dimensions = array<i32: 0>} : vector<8x128xi32>
      %163 = tpu.iota {dimensions = array<i32: 1>} : vector<8x128xi32>
      %164 = vector.broadcast %10 : i32 to vector<8x128xi32>
      %165 = arith.addi %164, %162 : vector<8x128xi32>
      %c128_i32 = arith.constant 128 : i32
      %166 = vector.broadcast %c128_i32 : i32 to vector<8x128xi32>
      %167 = arith.muli %165, %166 : vector<8x128xi32>
      %168 = vector.broadcast %1 : i32 to vector<8x128xi32>
      %169 = arith.addi %168, %167 : vector<8x128xi32>
      %170 = arith.addi %169, %163 : vector<8x128xi32>
      %171 = vector.broadcast %0 : i32 to vector<8x128xi32>
      %172 = arith.cmpi slt, %170, %171 : vector<8x128xi32>
      %cst_71 = arith.constant 0.000000e+00 : f32
      %173 = vector.broadcast %cst_71 : f32 to vector<8x128xf32>
      %174 = arith.select %172, %161, %173 : vector<8x128xi1>, vector<8x128xf32>
      %175 = arith.addf %9, %174 : vector<8x128xf32>
      %c0_72 = arith.constant 0 : index
      %c0_73 = arith.constant 0 : index
      %176 = vector.load %arg3[%c0_72, %c0_73] : memref<8x128xf32, #tpu.memory_space<vmem>>, vector<8x128xf32>
      tpu.vector_store %arg3[%c0_72, %c0_73], %175 {strides = array<i32>} : memref<8x128xf32, #tpu.memory_space<vmem>>, vector<8x128xf32>,
    } else {
    }
    return
  }
  func.func @transform_0(%arg0: i32, %arg1: memref<1xi32, #tpu.memory_space<smem>>) -> (i32, i32, i32, i32) {
    %c0_i32 = arith.constant 0 : i32
    %c0_i32_0 = arith.constant 0 : i32
    %c0_i32_1 = arith.constant 0 : i32
    %c0_i32_2 = arith.constant 0 : i32
    return %c0_i32, %c0_i32_0, %arg0, %c0_i32_1 : i32, i32, i32, i32
  }
  func.func @transform_1(%arg0: i32, %arg1: memref<1xi32, #tpu.memory_space<smem>>) -> (i32, i32) {
    %c0_i32 = arith.constant 0 : i32
    %c0_i32_0 = arith.constant 0 : i32
    return %arg0, %c0_i32 : i32, i32
  }
}

</mosaic_0001>

<llo_original>
// kernel: tpu_custom_call.1
$region0: #{tpu_custom_call.1}
  #allocation0 [shape = 'u32[]', space=smem, size = 0x4, offset = 0x4, fixed_abs, tag = 'smem constant byte address 0x4 - core index']
  #allocation1 [shape = 'u32[144,128]{1,0:T(1,128)}', space=vmem, size = 0x12000, scoped, tag = 'internal scratch']
  #allocation2 [shape = 's32[1]{0}', space=sflag, size = 0x4, scoped, tag = 'scoped memory for tpu_custom_call.1']
  #allocation3 [shape = 's32[1]{0:T(128)S(6)}', space=smem, size = 0x200, scoped, tag = 'prefetched SMEM operand 0']
  %s0 = inlined_call_operand.<no memory space> [shape: s32[1], index: 0, kind: input, shape index: {}]
  %s1 = inlined_call_operand.hbm [shape: f32[2,7,16,128], index: 1, kind: input, shape index: {}]
  %s2 = inlined_call_operand.hbm [shape: f32[16,128], index: 2, kind: output, shape index: {}]
  %s3 = sld [smem:[#allocation0]]
  $region49: #{tpu_custom_call.1} parent=0
    _
  %s5 = ssub.s32 1, %s3
  %s6 = scalar_select 0, %s5, %s3
  %7 = sst [smem:[#allocation3]] %s0
  $region1: #{tpu_custom_call.1} parent=0
    #allocation4 [shape = 'u8[114688]{0}', space=vmem, size = 0x1c000, scoped, tag = 'input window, operand 1']
    #allocation5 [shape = 's32[2]{0}', space=sflag, size = 0x8, scoped, tag = 'scoped memory for tpu_custom_call.1']
    #allocation6 [shape = 's32[2]{0}', space=sflag, size = 0x8, scoped, tag = 'scoped memory for tpu_custom_call.1']
    #allocation7 [shape = 'u8[8192]{0}', space=vmem, size = 0x2000, scoped, tag = 'output window, operand 0']
    %8 = vsyncpa [#allocation5], 0
    %s9 = scalar_lea.sflag [#allocation5], 1
    %10 = vsyncpa %s9, 0
    %11 = vsyncpa [#allocation6], 0
    %s12 = scalar_lea.sflag [#allocation6], 1
    %13 = vsyncpa %s12, 0
    loop: start=0, step=1, limit=4
    $region2: #{tpu_custom_call.1} parent=1 // loop_pre_header
      _
    $region3: #{tpu_custom_call.1} parent=1 // loop_header
      %s15 = sphi 0, %s19
      %p16 = scmp.ge.s32.totalorder %s15, 4
      %s25 = sphi 0, %s27
      %s28 = sphi 0, %s25
      %s29 = sphi 0, %s28
      %s45 = sphi 0, %s29
      %s51 = sphi 0, %s53
      %s54 = sphi 0, %s51
      %s55 = sphi 0, %s54
      %s71 = sphi 0, %s55
    $region4: #{tpu_custom_call.1} parent=1 // loop_header_branch
      %18 = sbr.rel (%p16) target = $region8
    $region5: #{tpu_custom_call.1} parent=1 // loop_body
      %s20 = ssub.s32 %s15, 1
      %s21 = ssub.s32 %s15, 2
      %s22 = sadd.s32 %s15, 1
      %s23 = ssub.s32 %s15, %s22
      %p24 = scmp.eq.s32.totalorder %s23, 0
      %s26 = sadd.s32 %s25, 1
      %s27 = scalar_select %p24, %s25, %s26
      %p30 = pneg %p24
      %p31 = scmp.eq.s32.totalorder %s15, 1
      %p32 = por %p30, %p31
      %p33 = scmp.ne.s32.totalorder %s25, %s28
      %p34 = scmp.eq.s32.totalorder %s15, 0
      %p35 = por %p33, %p34
      %p36 = scmp.ne.s32.totalorder %s25, %s28
      %p37 = scmp.eq.s32.totalorder %s20, 1
      %p38 = por %p36, %p37
      %p39 = scmp.ne.s32.totalorder %s28, %s29
      %p40 = scmp.eq.s32.totalorder %s20, 0
      %p41 = por %p39, %p40
      %p42 = scmp.ne.s32.totalorder %s28, %s29
      %p43 = scmp.eq.s32.totalorder %s21, 1
      %p44 = por %p42, %p43
      %p46 = scmp.ne.s32.totalorder %s29, %s45
      %p47 = scmp.eq.s32.totalorder %s21, 0
      %p48 = por %p46, %p47
      %s49 = ssub.s32 %s15, %s22
      %p50 = scmp.eq.s32.totalorder %s49, 0
      %s52 = sadd.s32 %s51, 1
      %s53 = scalar_select %p50, %s51, %s52
      %p56 = pneg %p50
      %p57 = scmp.eq.s32.totalorder %s15, 1
      %p58 = por %p56, %p57
      %p59 = scmp.ne.s32.totalorder %s51, %s54
      %p60 = scmp.eq.s32.totalorder %s15, 0
      %p61 = por %p59, %p60
      %p62 = scmp.ne.s32.totalorder %s51, %s54
      %p63 = scmp.eq.s32.totalorder %s20, 1
      %p64 = por %p62, %p63
      %p65 = scmp.ne.s32.totalorder %s54, %s55
      %p66 = scmp.eq.s32.totalorder %s20, 0
      %p67 = por %p65, %p66
      %p68 = scmp.ne.s32.totalorder %s54, %s55
      %p69 = scmp.eq.s32.totalorder %s21, 1
      %p70 = por %p68, %p69
      %p72 = scmp.ne.s32.totalorder %s55, %s71
      %p73 = scmp.eq.s32.totalorder %s21, 0
      %p74 = por %p72, %p73
      %p75 = scmp.le.s32.totalorder 1, %s15
      %p76 = scmp.lt.s32.totalorder %s15, 3
      %p77 = pnand %p75, %p76
      %p78 = pneg %p77
      // Predicated region
      $region9: #{tpu_custom_call.1} parent=5 // pred_check
        _
      $region10: #{tpu_custom_call.1} parent=5 // pred_check_branch
        %80 = sbr.rel (%p77) target = $region12
      $region11: #{tpu_custom_call.1} parent=5 // pred_region
        %s81 = ssub.s32 %s15, 1
      $region12: #{tpu_custom_call.1} parent=5 // pred_fallthru
        _
      %p82 = scmp.lt.s32.totalorder %s15, 2
      // Predicated region
      $region13: #{tpu_custom_call.1} parent=5 // pred_check
        %p83 = pneg %p82
      $region14: #{tpu_custom_call.1} parent=5 // pred_check_branch
        %85 = sbr.rel (%p83) target = $region16
      $region15: #{tpu_custom_call.1} parent=5 // pred_region
        // Predicated region
        $region17: #{tpu_custom_call.1} parent=15 // pred_check
          %p86 = pneg %p35
        $region18: #{tpu_custom_call.1} parent=15 // pred_check_branch
          %88 = sbr.rel (%p86) target = $region20
        $region19: #{tpu_custom_call.1} parent=15 // pred_region
          %s89 = sand.u32 %s25, 1
          %s90 = scalar_lea.sflag [#allocation5], %s89
          %s91 = sand.u32 %s25, 1
          %s92 = smul.addr %s91, 112
          %s93 = scalar_lea.vmem [#allocation4], %s92
          %s95 = ssub.s32 1792, 1792
          %96 = vsyncadd %s90, %s95
          %s97 = smul.addr %s15, 128
          %s98 = scalar_lea.hbm %s1, %s97
          %s99 = sshll.u32 %s93, 4
          %s100 = int_to_ptr.vmem [resolvable:$true] %s99
          %105 = dma.hbm_to_vmem [thread:$0]  %s98, 1792, %s100, %s90, 256, 128, 8
        $region20: #{tpu_custom_call.1} parent=15 // pred_fallthru
          _
      $region16: #{tpu_custom_call.1} parent=5 // pred_fallthru
        _
      %p106 = scmp.le.s32.totalorder 1, %s15
      %p107 = scmp.lt.s32.totalorder %s15, 3
      %p108 = pnand %p106, %p107
      %p109 = pneg %p108
      // Predicated region
      $region21: #{tpu_custom_call.1} parent=5 // pred_check
        _
      $region22: #{tpu_custom_call.1} parent=5 // pred_check_branch
        %111 = sbr.rel (%p108) target = $region24
      $region23: #{tpu_custom_call.1} parent=5 // pred_region
        %s112 = ssub.s32 %s15, 1
        %s113 = sand.u32 %s28, 1
        %s114 = scalar_lea.sflag [#allocation5], %s113
        %s115 = sand.u32 %s28, 1
        %s116 = smul.addr %s115, 112
        %s117 = scalar_lea.vmem [#allocation4], %s116
        // Predicated region
        $region25: #{tpu_custom_call.1} parent=23 // pred_check
          %p118 = pneg %p41
        $region26: #{tpu_custom_call.1} parent=23 // pred_check_branch
          %120 = sbr.rel (%p118) target = $region28
        $region27: #{tpu_custom_call.1} parent=23 // pred_region
          %121 = dma.done %s114, 1792
        $region28: #{tpu_custom_call.1} parent=23 // pred_fallthru
          _
        %s122 = sand.u32 %s28, 1
        %s123 = scalar_lea.sflag [#allocation5], %s122
        %s124 = sand.u32 %s28, 1
        %s125 = smul.addr %s124, 112
        %s126 = scalar_lea.vmem [#allocation4], %s125
        %p127 = pneg %p41
        %p128 = pneg %p38
        %p129 = pneg %p67
        %p130 = pneg %p64
        %s131 = sand.u32 %s54, 1
        %s132 = scalar_lea.sflag [#allocation6], %s131
        %s133 = sand.u32 %s54, 1
        %s134 = smul.addr %s133, 8
        %s135 = scalar_lea.vmem [#allocation7], %s134
        %s136 = sld [smem:[#allocation3]]
        %s137 = smul.u32 %s20, 1024
        %s138 = sadd.s32 %s137, 1024
        %p139 = scmp.le.s32.totalorder %s138, %s136
        // Predicated region
        $region29: #{tpu_custom_call.1} parent=23 // pred_check
          %p140 = pneg %p139
        $region30: #{tpu_custom_call.1} parent=23 // pred_check_branch
          %142 = sbr.rel (%p140) target = $region32
        $region31: #{tpu_custom_call.1} parent=23 // pred_region
          %v143 = vld [vmem:[%s117] sm:$0xff]
          %s144 = sadd.s32 0, 8
          %s145 = scalar_lea.vmem %s117, %s144 [#allocation4]
          %v146 = vld [vmem:[%s145] sm:$0xff]
          %s147 = sadd.s32 0, 16
          %s148 = scalar_lea.vmem %s117, %s147 [#allocation4]
          %v149 = vld [vmem:[%s148] sm:$0xff]
          %s150 = sadd.s32 0, 24
          %s151 = scalar_lea.vmem %s117, %s150 [#allocation4]
          %v152 = vld [vmem:[%s151] sm:$0xff]
          %s153 = sadd.s32 0, 32
          %s154 = scalar_lea.vmem %s117, %s153 [#allocation4]
          %v155 = vld [vmem:[%s154] sm:$0xff]
          %s156 = sadd.s32 0, 40
          %s157 = scalar_lea.vmem %s117, %s156 [#allocation4]
          %v158 = vld [vmem:[%s157] sm:$0xff]
          %s159 = sadd.s32 0, 48
          %s160 = scalar_lea.vmem %s117, %s159 [#allocation4]
          %v161 = vld [vmem:[%s160] sm:$0xff]
          %v162 = vmul.f32 %v158, 0.5
          %v163 = vadd.f32 %v149, %v162
          %v164 = vmax.f32 %v152, 1e-07
          %v165 = vmin.f32 %v164, 10000000.0
          %v166 = vmax.f32 %v155, 1e-07
          %v167 = vmin.f32 %v166, 10000000.0
          %v168 = vmax.f32 %v158, 1e-07
          %v169 = vmin.f32 %v168, 10000000.0
          %v170 = vmul.f32 %v165, 0.5
          %v171 = vmul.f32 %v167, 0.5
          %v172 = vmul.f32 %v169, 0.5
          %s173 = sadd.s32 0, 56
          %s174 = scalar_lea.vmem %s117, %s173 [#allocation4]
          %v175 = vld [vmem:[%s174] sm:$0xff]
          %s176 = sadd.s32 %s144, 56
          %s177 = scalar_lea.vmem %s117, %s176 [#allocation4]
          %v178 = vld [vmem:[%s177] sm:$0xff]
          %s179 = sadd.s32 %s147, 56
          %s180 = scalar_lea.vmem %s117, %s179 [#allocation4]
          %v181 = vld [vmem:[%s180] sm:$0xff]
          %s182 = sadd.s32 %s150, 56
          %s183 = scalar_lea.vmem %s117, %s182 [#allocation4]
          %v184 = vld [vmem:[%s183] sm:$0xff]
          %s185 = sadd.s32 %s153, 56
          %s186 = scalar_lea.vmem %s117, %s185 [#allocation4]
          %v187 = vld [vmem:[%s186] sm:$0xff]
          %s188 = sadd.s32 %s156, 56
          %s189 = scalar_lea.vmem %s117, %s188 [#allocation4]
          %v190 = vld [vmem:[%s189] sm:$0xff]
          %s191 = sadd.s32 %s159, 56
          %s192 = scalar_lea.vmem %s117, %s191 [#allocation4]
          %v193 = vld [vmem:[%s192] sm:$0xff]
          %v194 = vmul.f32 %v190, 0.5
          %v195 = vadd.f32 %v181, %v194
          %v196 = vmax.f32 %v184, 1e-07
          %v197 = vmin.f32 %v196, 10000000.0
          %v198 = vmax.f32 %v187, 1e-07
          %v199 = vmin.f32 %v198, 10000000.0
          %v200 = vmax.f32 %v190, 1e-07
          %v201 = vmin.f32 %v200, 10000000.0
          %v202 = vmul.f32 %v197, 0.5
          %v203 = vmul.f32 %v199, 0.5
          %v204 = vmul.f32 %v201, 0.5
          %v205 = vsub.f32 %v143, %v175
          %v206 = vmul.f32 %v205, %v205
          %v207 = vsub.f32 %v146, %v178
          %v208 = vmul.f32 %v207, %v207
          %v209 = vadd.f32 %v206, %v208
          %v210 = vsub.f32 %v163, %v195
          %v211 = vmul.f32 %v210, %v210
          %v212 = vadd.f32 %v209, %v211
          %v213 = vmul.f32 %v170, %v170
          %v214 = vmul.f32 %v171, %v171
          %v215 = vmul.f32 %v202, %v202
          %v216 = vmul.f32 %v203, %v203
          %v217 = vadd.f32 %v213, %v214
          %v218 = vadd.f32 %v215, %v216
          %v219 = vmul.f32 %v217, %v218
          %v220 = vsub.f32 %v213, %v214
          %v221 = vsub.f32 %v215, %v216
          %v222 = vmul.f32 %v220, %v221
          %v223 = vsub.f32 %v161, %v193
          %v224 = vmul.f32 %v223, 2.0
          %v225 = vand.u32 2147483647, %v224
          %vm226 = vcmp.le.f32.partialorder %v225, 0.7853982
          %vm227 = vcmp.lt.s32.totalorder %v224, 0
          %v228 = vand.u32 %v224, 2139095040
          %v229 = vshrl.u32 %v228, 23
          %v230 = vsub.s32 %v229, 127
          %v231 = vand.u32 2147483647, %v224
          %v232 = vand.u32 %v231, 8388607
          %v233 = vor.u32 %v232, 8388608
          %v234 = vsub.s32 0, %v233
          %v235 = vadd.s32 %v230, 1
          %vm236 = vcmp.gt.s32.totalorder %v235, 0
          %v237 = vsel %vm236, %v235, 0
          %v238 = vshrl.u32 %v237, 5
          %v239 = vand.u32 %v237, 31
          %v240 = vsub.s32 32, %v239
          %v241 = vshrl.u32 683565275, %v240
          %v242 = vshll.u32 683565275, %v239
          %v243 = vshrl.u32 2475754826, %v240
          %v244 = vor.u32 %v242, %v243
          %v245 = vshll.u32 2475754826, %v239
          %v246 = vshrl.u32 2131351028, %v240
          %v247 = vor.u32 %v245, %v246
          %v248 = vshll.u32 2131351028, %v239
          %v249 = vshrl.u32 2102212464, %v240
          %v250 = vor.u32 %v248, %v249
          %v251 = vshll.u32 2102212464, %v239
          %v252 = vshrl.u32 920167782, %v240
          %v253 = vor.u32 %v251, %v252
          %v254 = vshll.u32 920167782, %v239
          %v255 = vshrl.u32 1326507024, %v240
          %v256 = vor.u32 %v254, %v255
          %vm257 = vcmp.lt.s32.totalorder %v238, 1
          %vm258 = vcmp.lt.s32.totalorder %v238, 2
          %vm259 = vcmp.lt.s32.totalorder %v238, 3
          %vm260 = vcmp.lt.s32.totalorder %v238, 4
          %v261 = vsel %vm257, %v241, %v244
          %v262 = vsel %vm260, %v250, 2102212464
          %v263 = vsel %vm259, %v247, %v262
          %v264 = vsel %vm258, %v261, %v263
          %v265 = vsel %vm257, %v244, %v247
          %v266 = vsel %vm260, %v253, 920167782
          %v267 = vsel %vm259, %v250, %v266
          %v268 = vsel %vm258, %v265, %v267
          %v269 = vsel %vm257, %v247, %v250
          %v270 = vsel %vm260, %v256, 1326507024
          %v271 = vsel %vm259, %v253, %v270
          %v272 = vsel %vm258, %v269, %v271
          %v273 = vshll.u32 %v233, 8
          %v274 = vmul.u32.u64.compose %v273, %v272
          %v275 = vextract.low.u32 %v274
          %v276 = vextract.high.u32 %v274
          %v277 = vmul.u32.u64.compose %v273, %v268
          %v278 = vextract.low.u32 %v277
          %v279 = vextract.high.u32 %v277
          %v280 = vmul.u32 %v273, %v264
          %v281 = vadd.s32 %v276, %v278
          %vm282 = vc.u32 %v276, %v278
          %v283 = vadd.s32 %v279, 1
          %v284 = vsel %vm282, %v283, %v279
          %v285 = vadd.s32 %v280, %v284
          %v286 = vadd.s32 %v285, 536870912
          %v287 = vshrl.u32 %v286, 30
          %v288 = vshll.u32 %v287, 30
          %v289 = vsub.s32 %v285, %v288
          %vm290 = vcmp.lt.s32.totalorder %v289, 0
          %v291 = vsub.s32 0, %v289
          %v292 = vsel %vm290, %v291, %v289
          %v293 = vclz %v292
          %v294 = vsub.s32 %v293, 2
          %vm295 = vcmp.gt.s32.totalorder 0, %v294
          %v296 = vsel %vm295, 0, %v294
          %v297 = vsub.s32 32, %v296
          %v298 = vshll.u32 %v289, %v296
          %v299 = vshrl.u32 %v281, %v297
          %v300 = vor.u32 %v298, %v299
          %v301 = vsub.s32 4294967266, %v296
          %v302 = vadd.s32 %v301, 127
          %v303 = vshll.u32 %v302, 23
          %v304 = vor.u32 4788187, %v303
          %v305 = vand.u32 2147483647, %v304
          %v307 = vcvt.s32.f32 %v300
          %v308 = vmul.f32 %v307, %v305
          %v309 = vxor.u32 %v308, 2147483648
          %v310 = vsel %vm227, %v309, %v308
          %v311 = vsub.s32 4, %v287
          %v312 = vsel %vm227, %v311, %v287
          %v313 = vsel %vm226, %v224, %v310
          %v314 = vsel %vm226, 0, %v312
          %v315 = vcosq.f32.pop %v313
          %v316 = vsinq.f32.pop %v313
          %vm317 = vweird.f32 %v224
          %v318 = vand.u32 %v314, 3
          %vm319 = vcmp.lt.s32.totalorder %v318, 2
          %vm320 = vcmp.eq.s32.totalorder %v318, 0
          %v321 = vxor.u32 %v316, 2147483648
          %v322 = vsel %vm320, %v315, %v321
          %vm323 = vcmp.eq.s32.totalorder %v318, 2
          %v324 = vxor.u32 %v315, 2147483648
          %v325 = vsel %vm323, %v324, %v316
          %v326 = vsel %vm319, %v322, %v325
          %v327 = vsel %vm317, nan, %v326
          %v328 = vmul.f32 %v222, %v327
          %v329 = vadd.f32 %v219, %v328
          %v330 = vmul.f32 %v329, 0.5
          %v331 = vmul.f32 %v170, %v171
          %v332 = vmul.f32 %v202, %v203
          %v333 = vmul.f32 %v331, %v332
          %v334 = vadd.f32 %v217, %v215
          %v335 = vadd.f32 %v334, %v216
          %v336 = vmul.f32 %v333, 2.0
          %v337 = vadd.f32 %v330, %v336
          %v338 = vmax.f32 %v337, 0.0
          %v339 = vrsqrt.pop %v338
          %v340 = vmul.f32 %v338, %v339
          %vm341 = vcmp.eq.f32.partialorder %v338, inf
          %v342 = vsel %vm341, %v338, %v340
          %vm343 = vcmp.eq.f32.partialorder %v338, 0.0
          %v344 = vand.u32 %v338, 2147483648
          %v345 = vsel %vm343, %v344, %v342
          %v346 = vmul.f32 %v345, 2.0
          %v347 = vsub.f32 %v335, %v346
          %v348 = vsub.f32 %v172, %v204
          %v349 = vmul.f32 %v348, %v348
          %v350 = vadd.f32 %v347, %v349
          %v351 = vadd.f32 %v212, %v350
          %v352 = vmax.f32 %v351, 0.0
          %v353 = vrsqrt.pop %v352
          %v354 = vmul.f32 %v352, %v353
          %vm355 = vcmp.eq.f32.partialorder %v352, inf
          %v356 = vsel %vm355, %v352, %v354
          %vm357 = vcmp.eq.f32.partialorder %v352, 0.0
          %v358 = vand.u32 %v352, 2147483648
          %v359 = vsel %vm357, %v358, %v356
          %v360 = vlog2.pop %v333
          %v361 = vmul.f32 %v360, 0.6931472
          %v362 = vmul.f32 %v172, %v204
          %v363 = vlog2.pop %v362
          %v364 = vmul.f32 %v363, 0.6931472
          %v365 = vadd.f32 %v361, %v364
          %v366 = vmul.f32 %v365, -0.16666667
          %v367 = vmul.f32 %v366, 1.442695
          %v368 = vpow.pop %v367
          %v369 = vmul.f32 %v368, 0.5
          %v370 = vmul.f32 %v359, %v369
          %v371 = vadd.f32 %v370, 1.0
          %v372 = vlog2.pop %v371
          %v373 = vmul.f32 %v372, 0.6931472
          %v374 = vmul.f32 -0.5, %v370
          %v375 = vadd.f32 %v374, 1.0
          %v376 = vmul.f32 %v375, %v370
          %v377 = vand.u32 2147483647, %v370
          %vm378 = vcmp.lt.f32.partialorder %v377, 0.0004427343
          %v379 = vsel %vm378, %v376, %v373
          %v380 = vadd.f32 %v379, 1.0
          %v381 = vrcp.pop %v380
          %v382 = vmul.f32 1.0, %v381
          %v383 = vsub.f32 1.0, %v382
          %v384 = vadd.f32 %v383, 0.0
          %385 = vst [vmem:[%s135] sm:$0xff] %v384
        $region32: #{tpu_custom_call.1} parent=23 // pred_fallthru
          _
        %p386 = scmp.gt.s32.totalorder %s138, %s136
        // Predicated region
        $region33: #{tpu_custom_call.1} parent=23 // pred_check
          %p387 = pneg %p386
        $region34: #{tpu_custom_call.1} parent=23 // pred_check_branch
          %389 = sbr.rel (%p387) target = $region36
        $region35: #{tpu_custom_call.1} parent=23 // pred_region
          %v390 = vld [vmem:[%s117] sm:$0xff]
          %s391 = sadd.s32 0, 8
          %s392 = scalar_lea.vmem %s117, %s391 [#allocation4]
          %v393 = vld [vmem:[%s392] sm:$0xff]
          %s394 = sadd.s32 0, 16
          %s395 = scalar_lea.vmem %s117, %s394 [#allocation4]
          %v396 = vld [vmem:[%s395] sm:$0xff]
          %s397 = sadd.s32 0, 24
          %s398 = scalar_lea.vmem %s117, %s397 [#allocation4]
          %v399 = vld [vmem:[%s398] sm:$0xff]
          %s400 = sadd.s32 0, 32
          %s401 = scalar_lea.vmem %s117, %s400 [#allocation4]
          %v402 = vld [vmem:[%s401] sm:$0xff]
          %s403 = sadd.s32 0, 40
          %s404 = scalar_lea.vmem %s117, %s403 [#allocation4]
          %v405 = vld [vmem:[%s404] sm:$0xff]
          %s406 = sadd.s32 0, 48
          %s407 = scalar_lea.vmem %s117, %s406 [#allocation4]
          %v408 = vld [vmem:[%s407] sm:$0xff]
          %v409 = vmul.f32 %v405, 0.5
          %v410 = vadd.f32 %v396, %v409
          %v411 = vmax.f32 %v399, 1e-07
          %v412 = vmin.f32 %v411, 10000000.0
          %v413 = vmax.f32 %v402, 1e-07
          %v414 = vmin.f32 %v413, 10000000.0
          %v415 = vmax.f32 %v405, 1e-07
          %v416 = vmin.f32 %v415, 10000000.0
          %v417 = vmul.f32 %v412, 0.5
          %v418 = vmul.f32 %v414, 0.5
          %v419 = vmul.f32 %v416, 0.5
          %s420 = sadd.s32 0, 56
          %s421 = scalar_lea.vmem %s117, %s420 [#allocation4]
          %v422 = vld [vmem:[%s421] sm:$0xff]
          %s423 = sadd.s32 %s391, 56
          %s424 = scalar_lea.vmem %s117, %s423 [#allocation4]
          %v425 = vld [vmem:[%s424] sm:$0xff]
          %s426 = sadd.s32 %s394, 56
          %s427 = scalar_lea.vmem %s117, %s426 [#allocation4]
          %v428 = vld [vmem:[%s427] sm:$0xff]
          %s429 = sadd.s32 %s397, 56
          %s430 = scalar_lea.vmem %s117, %s429 [#allocation4]
          %v431 = vld [vmem:[%s430] sm:$0xff]
          %s432 = sadd.s32 %s400, 56
          %s433 = scalar_lea.vmem %s117, %s432 [#allocation4]
          %v434 = vld [vmem:[%s433] sm:$0xff]
          %s435 = sadd.s32 %s403, 56
          %s436 = scalar_lea.vmem %s117, %s435 [#allocation4]
          %v437 = vld [vmem:[%s436] sm:$0xff]
          %s438 = sadd.s32 %s406, 56
          %s439 = scalar_lea.vmem %s117, %s438 [#allocation4]
          %v440 = vld [vmem:[%s439] sm:$0xff]
          %v441 = vmul.f32 %v437, 0.5
          %v442 = vadd.f32 %v428, %v441
          %v443 = vmax.f32 %v431, 1e-07
          %v444 = vmin.f32 %v443, 10000000.0
          %v445 = vmax.f32 %v434, 1e-07
          %v446 = vmin.f32 %v445, 10000000.0
          %v447 = vmax.f32 %v437, 1e-07
          %v448 = vmin.f32 %v447, 10000000.0
          %v449 = vmul.f32 %v444, 0.5
          %v450 = vmul.f32 %v446, 0.5
          %v451 = vmul.f32 %v448, 0.5
          %v452 = vsub.f32 %v390, %v422
          %v453 = vmul.f32 %v452, %v452
          %v454 = vsub.f32 %v393, %v425
          %v455 = vmul.f32 %v454, %v454
          %v456 = vadd.f32 %v453, %v455
          %v457 = vsub.f32 %v410, %v442
          %v458 = vmul.f32 %v457, %v457
          %v459 = vadd.f32 %v456, %v458
          %v460 = vmul.f32 %v417, %v417
          %v461 = vmul.f32 %v418, %v418
          %v462 = vmul.f32 %v449, %v449
          %v463 = vmul.f32 %v450, %v450
          %v464 = vadd.f32 %v460, %v461
          %v465 = vadd.f32 %v462, %v463
          %v466 = vmul.f32 %v464, %v465
          %v467 = vsub.f32 %v460, %v461
          %v468 = vsub.f32 %v462, %v463
          %v469 = vmul.f32 %v467, %v468
          %v470 = vsub.f32 %v408, %v440
          %v471 = vmul.f32 %v470, 2.0
          %v472 = vand.u32 2147483647, %v471
          %vm473 = vcmp.le.f32.partialorder %v472, 0.7853982
          %vm474 = vcmp.lt.s32.totalorder %v471, 0
          %v475 = vand.u32 %v471, 2139095040
          %v476 = vshrl.u32 %v475, 23
          %v477 = vsub.s32 %v476, 127
          %v478 = vand.u32 2147483647, %v471
          %v479 = vand.u32 %v478, 8388607
          %v480 = vor.u32 %v479, 8388608
          %v481 = vsub.s32 0, %v480
          %v482 = vadd.s32 %v477, 1
          %vm483 = vcmp.gt.s32.totalorder %v482, 0
          %v484 = vsel %vm483, %v482, 0
          %v485 = vshrl.u32 %v484, 5
          %v486 = vand.u32 %v484, 31
          %v487 = vsub.s32 32, %v486
          %v488 = vshrl.u32 683565275, %v487
          %v489 = vshll.u32 683565275, %v486
          %v490 = vshrl.u32 2475754826, %v487
          %v491 = vor.u32 %v489, %v490
          %v492 = vshll.u32 2475754826, %v486
          %v493 = vshrl.u32 2131351028, %v487
          %v494 = vor.u32 %v492, %v493
          %v495 = vshll.u32 2131351028, %v486
          %v496 = vshrl.u32 2102212464, %v487
          %v497 = vor.u32 %v495, %v496
          %v498 = vshll.u32 2102212464, %v486
          %v499 = vshrl.u32 920167782, %v487
          %v500 = vor.u32 %v498, %v499
          %v501 = vshll.u32 920167782, %v486
          %v502 = vshrl.u32 1326507024, %v487
          %v503 = vor.u32 %v501, %v502
          %vm504 = vcmp.lt.s32.totalorder %v485, 1
          %vm505 = vcmp.lt.s32.totalorder %v485, 2
          %vm506 = vcmp.lt.s32.totalorder %v485, 3
          %vm507 = vcmp.lt.s32.totalorder %v485, 4
          %v508 = vsel %vm504, %v488, %v491
          %v509 = vsel %vm507, %v497, 2102212464
          %v510 = vsel %vm506, %v494, %v509
          %v511 = vsel %vm505, %v508, %v510
          %v512 = vsel %vm504, %v491, %v494
          %v513 = vsel %vm507, %v500, 920167782
          %v514 = vsel %vm506, %v497, %v513
          %v515 = vsel %vm505, %v512, %v514
          %v516 = vsel %vm504, %v494, %v497
          %v517 = vsel %vm507, %v503, 1326507024
          %v518 = vsel %vm506, %v500, %v517
          %v519 = vsel %vm505, %v516, %v518
          %v520 = vshll.u32 %v480, 8
          %v521 = vmul.u32.u64.compose %v520, %v519
          %v522 = vextract.low.u32 %v521
          %v523 = vextract.high.u32 %v521
          %v524 = vmul.u32.u64.compose %v520, %v515
          %v525 = vextract.low.u32 %v524
          %v526 = vextract.high.u32 %v524
          %v527 = vmul.u32 %v520, %v511
          %v528 = vadd.s32 %v523, %v525
          %vm529 = vc.u32 %v523, %v525
          %v530 = vadd.s32 %v526, 1
          %v531 = vsel %vm529, %v530, %v526
          %v532 = vadd.s32 %v527, %v531
          %v533 = vadd.s32 %v532, 536870912
          %v534 = vshrl.u32 %v533, 30
          %v535 = vshll.u32 %v534, 30
          %v536 = vsub.s32 %v532, %v535
          %vm537 = vcmp.lt.s32.totalorder %v536, 0
          %v538 = vsub.s32 0, %v536
          %v539 = vsel %vm537, %v538, %v536
          %v540 = vclz %v539
          %v541 = vsub.s32 %v540, 2
          %vm542 = vcmp.gt.s32.totalorder 0, %v541
          %v543 = vsel %vm542, 0, %v541
          %v544 = vsub.s32 32, %v543
          %v545 = vshll.u32 %v536, %v543
          %v546 = vshrl.u32 %v528, %v544
          %v547 = vor.u32 %v545, %v546
          %v548 = vsub.s32 4294967266, %v543
          %v549 = vadd.s32 %v548, 127
          %v550 = vshll.u32 %v549, 23
          %v551 = vor.u32 4788187, %v550
          %v552 = vand.u32 2147483647, %v551
          %v554 = vcvt.s32.f32 %v547
          %v555 = vmul.f32 %v554, %v552
          %v556 = vxor.u32 %v555, 2147483648
          %v557 = vsel %vm474, %v556, %v555
          %v558 = vsub.s32 4, %v534
          %v559 = vsel %vm474, %v558, %v534
          %v560 = vsel %vm473, %v471, %v557
          %v561 = vsel %vm473, 0, %v559
          %v562 = vcosq.f32.pop %v560
          %v563 = vsinq.f32.pop %v560
          %vm564 = vweird.f32 %v471
          %v565 = vand.u32 %v561, 3
          %vm566 = vcmp.lt.s32.totalorder %v565, 2
          %vm567 = vcmp.eq.s32.totalorder %v565, 0
          %v568 = vxor.u32 %v563, 2147483648
          %v569 = vsel %vm567, %v562, %v568
          %vm570 = vcmp.eq.s32.totalorder %v565, 2
          %v571 = vxor.u32 %v562, 2147483648
          %v572 = vsel %vm570, %v571, %v563
          %v573 = vsel %vm566, %v569, %v572
          %v574 = vsel %vm564, nan, %v573
          %v575 = vmul.f32 %v469, %v574
          %v576 = vadd.f32 %v466, %v575
          %v577 = vmul.f32 %v576, 0.5
          %v578 = vmul.f32 %v417, %v418
          %v579 = vmul.f32 %v449, %v450
          %v580 = vmul.f32 %v578, %v579
          %v581 = vadd.f32 %v464, %v462
          %v582 = vadd.f32 %v581, %v463
          %v583 = vmul.f32 %v580, 2.0
          %v584 = vadd.f32 %v577, %v583
          %v585 = vmax.f32 %v584, 0.0
          %v586 = vrsqrt.pop %v585
          %v587 = vmul.f32 %v585, %v586
          %vm588 = vcmp.eq.f32.partialorder %v585, inf
          %v589 = vsel %vm588, %v585, %v587
          %vm590 = vcmp.eq.f32.partialorder %v585, 0.0
          %v591 = vand.u32 %v585, 2147483648
          %v592 = vsel %vm590, %v591, %v589
          %v593 = vmul.f32 %v592, 2.0
          %v594 = vsub.f32 %v582, %v593
          %v595 = vsub.f32 %v419, %v451
          %v596 = vmul.f32 %v595, %v595
          %v597 = vadd.f32 %v594, %v596
          %v598 = vadd.f32 %v459, %v597
          %v599 = vmax.f32 %v598, 0.0
          %v600 = vrsqrt.pop %v599
          %v601 = vmul.f32 %v599, %v600
          %vm602 = vcmp.eq.f32.partialorder %v599, inf
          %v603 = vsel %vm602, %v599, %v601
          %vm604 = vcmp.eq.f32.partialorder %v599, 0.0
          %v605 = vand.u32 %v599, 2147483648
          %v606 = vsel %vm604, %v605, %v603
          %v607 = vlog2.pop %v580
          %v608 = vmul.f32 %v607, 0.6931472
          %v609 = vmul.f32 %v419, %v451
          %v610 = vlog2.pop %v609
          %v611 = vmul.f32 %v610, 0.6931472
          %v612 = vadd.f32 %v608, %v611
          %v613 = vmul.f32 %v612, -0.16666667
          %v614 = vmul.f32 %v613, 1.442695
          %v615 = vpow.pop %v614
          %v616 = vmul.f32 %v615, 0.5
          %v617 = vmul.f32 %v606, %v616
          %v618 = vadd.f32 %v617, 1.0
          %v619 = vlog2.pop %v618
          %v620 = vmul.f32 %v619, 0.6931472
          %v621 = vmul.f32 -0.5, %v617
          %v622 = vadd.f32 %v621, 1.0
          %v623 = vmul.f32 %v622, %v617
          %v624 = vand.u32 2147483647, %v617
          %vm625 = vcmp.lt.f32.partialorder %v624, 0.0004427343
          %v626 = vsel %vm625, %v623, %v620
          %v627 = vadd.f32 %v626, 1.0
          %v628 = vrcp.pop %v627
          %v629 = vmul.f32 1.0, %v628
          %v630 = vsub.f32 1.0, %v629
          %v631 = vlaneseq
          %v632 = vshrl.u32 %v631, 7
          %v633 = vlaneseq
          %v634 = vand.u32 %v633, 127
          %v635 = vstv 0
          %v636 = vadd.s32 %v635, %v632
          %v637 = vmul.u32 %v636, 128
          %v638 = vstv %s137
          %v639 = vadd.s32 %v638, %v637
          %v640 = vadd.s32 %v639, %v634
          %v641 = vstv %s136
          %vm642 = vcmp.lt.s32.totalorder %v640, %v641
          %v643 = vsel %vm642, %v630, 0.0
          %v644 = vadd.f32 %v643, 0.0
          %645 = vst [vmem:[%s135] sm:$0xff] %v644
        $region36: #{tpu_custom_call.1} parent=23 // pred_fallthru
          _
        %s646 = sand.u32 %s54, 1
        %s647 = scalar_lea.sflag [#allocation6], %s646
        %s648 = sand.u32 %s54, 1
        %s649 = smul.addr %s648, 8
        %s650 = scalar_lea.vmem [#allocation7], %s649
        // Predicated region
        $region37: #{tpu_custom_call.1} parent=23 // pred_check
          %p651 = pneg %p64
        $region38: #{tpu_custom_call.1} parent=23 // pred_check_branch
          %653 = sbr.rel (%p651) target = $region40
        $region39: #{tpu_custom_call.1} parent=23 // pred_region
          %s655 = ssub.s32 128, 128
          %656 = vsyncadd %s647, %s655
          %s657 = smul.addr %s20, 128
          %s658 = scalar_lea.hbm %s2, %s657
          %s660 = sshll.u32 %s650, 4
          %s661 = int_to_ptr.vmem [resolvable:$true] %s660
          %663 = dma.vmem_to_hbm [thread:$0]  %s661, 128, %s658, %s647
        $region40: #{tpu_custom_call.1} parent=23 // pred_fallthru
          _
      $region24: #{tpu_custom_call.1} parent=5 // pred_fallthru
        _
      %p664 = scmp.le.s32.totalorder 2, %s15
      // Predicated region
      $region41: #{tpu_custom_call.1} parent=5 // pred_check
        %p665 = pneg %p664
      $region42: #{tpu_custom_call.1} parent=5 // pred_check_branch
        %667 = sbr.rel (%p665) target = $region44
      $region43: #{tpu_custom_call.1} parent=5 // pred_region
        %s668 = ssub.s32 %s15, 2
        // Predicated region
        $region45: #{tpu_custom_call.1} parent=43 // pred_check
          %p669 = pneg %p70
        $region46: #{tpu_custom_call.1} parent=43 // pred_check_branch
          %671 = sbr.rel (%p669) target = $region48
        $region47: #{tpu_custom_call.1} parent=43 // pred_region
          %s672 = sand.u32 %s55, 1
          %s673 = scalar_lea.sflag [#allocation6], %s672
          %s674 = sand.u32 %s55, 1
          %s675 = smul.addr %s674, 8
          %s676 = scalar_lea.vmem [#allocation7], %s675
          %677 = dma.done %s673, 128
        $region48: #{tpu_custom_call.1} parent=43 // pred_fallthru
          _
      $region44: #{tpu_custom_call.1} parent=5 // pred_fallthru
        _
    $region6: #{tpu_custom_call.1} parent=1 // loop_footer
      %s19 = sadd.s32 1, %s15
    $region7: #{tpu_custom_call.1} parent=1 // loop_footer_branch
      %14 = sbr.rel target = $region3
    $region8: #{tpu_custom_call.1} parent=1 // loop_exit
      _
    %678 = vsyncpa [#allocation5], 1
    %s679 = scalar_lea.sflag [#allocation5], 1
    %680 = vsyncpa %s679, 1
    %681 = vsyncpa [#allocation6], 1
    %s682 = scalar_lea.sflag [#allocation6], 1
    %683 = vsyncpa %s682, 1

</llo_original>
